<compile_context>
chip_gen: v5e
topology: v5e:2x2
jax: 0.10.0
libtpu: 0.0.40
codegen_flags: <defaults>
</compile_context>

<pallas_src>
import jax
import jax.numpy as jnp
from jax.experimental import pallas as pl
from jax.experimental.pallas import tpu as pltpu


MAX_BLOCK_BYTES = 4 * 1024 * 1024     # per-input block budget (f32 working bytes)
VMEM_LIMIT_BYTES = 40 * 1024 * 1024   # explicit scoped-VMEM limit (>> v5e's 16 MiB default)


def _cdiv(a, b):
    return (a + b - 1) // b


def _fold_lanes(x):
    """(rows, W) -> (rows, min(W, 128)) by summing 128-lane column groups.

    Uses only 128-aligned lane slices (whole-vreg VPU adds, no cross-lane work);
    the single cross-lane reduction is deferred to the per-row-block finalize.
    """
    rows, w = x.shape
    if w > 128 and w % 128 != 0:
        pad = 128 * _cdiv(w, 128) - w
        x = jnp.concatenate([x, jnp.zeros((rows, pad), x.dtype)], axis=-1)
        w = x.shape[-1]
    while w > 128:
        ngroups = w // 128
        h = (ngroups + 1) // 2
        split = h * 128
        lo = x[:, :split]
        hi = x[:, split:]
        if hi.shape[-1] < split:          # odd group count
            hi = jnp.concatenate(
                [hi, jnp.zeros((rows, split - hi.shape[-1]), x.dtype)], axis=-1)
        x = lo + hi
        w = split
    return x


def _make_kernel(row_tile, lane_tile, nlb_inner, nlb_total, n_rows, n_lanes, need_mask):
    """Grid = (row_blocks, chunks, lane_blocks); lane_blocks is the reduction axis."""

    def kernel(pred_ref, mask_ref, w_ref, out_ref, acc_ref):
        j = pl.program_id(2)

        @pl.when(j == 0)
        def _():
            acc_ref[...] = jnp.zeros_like(acc_ref)

        pred = pred_ref[...].astype(jnp.float32)      # (row_tile, lane_tile)
        msk = mask_ref[...].astype(jnp.float32)

        if need_mask:
            # Ragged row/lane tails (and clamped duplicate blocks) hold undefined
            # data: zero them with a select BEFORE any arithmetic (garbage may be NaN).
            i = pl.program_id(0)
            p = pl.program_id(1)
            g = p * nlb_inner + j                     # logical (unclamped) lane block
            lane0 = g * lane_tile
            lane_ids = lane0 + jax.lax.broadcasted_iota(jnp.int32, pred.shape, 1)
            row_ids = i * row_tile + jax.lax.broadcasted_iota(jnp.int32, pred.shape, 0)
            valid = (lane_ids < n_lanes) & (row_ids < n_rows)
            pred = jnp.where(valid, pred, 0.0)
            msk = jnp.where(valid, msk, 0.0)

        # Lane-dense accumulation: one full-tile VPU multiply + 128-aligned folds.
        acc_ref[0] += _fold_lanes(pred * msk)
        acc_ref[1] += _fold_lanes(pred)
        acc_ref[2] += _fold_lanes(msk)

        @pl.when(j == pl.num_programs(2) - 1)
        def _():
            w = w_ref[...]                                       # (row_tile, 1) f32
            s_pm = jnp.sum(acc_ref[0], axis=-1, keepdims=True)   # (row_tile, 1)
            s_p = jnp.sum(acc_ref[1], axis=-1, keepdims=True)
            s_m = jnp.sum(acc_ref[2], axis=-1, keepdims=True)
            inter = jnp.sum(w * s_pm)                            # scalar
            union = jnp.sum(w * (s_p + s_m))                     # scalar
            cols = jax.lax.broadcasted_iota(jnp.int32, (row_tile, 128), 1)
            # Lane-dense unmasked store: col 0 carries inter, col 1 carries union.
            out_ref[0, 0] = jnp.where(cols == 0, inter,
                                      jnp.where(cols == 1, union, 0.0))

    return kernel


def dice_loss(pred_mask, mask, weights=None, num_cls=4):
    """Pallas equivalent of DICELoss.forward. Inputs are NCHW (f32 or bf16).

    Notes: union == 0 yields inf/nan (no eps, same as PyTorch). bf16 inputs are
    used as-is (products of bf16-rounded values); accumulation is always f32.
    """
    if weights is not None and len(weights) != num_cls:
        raise Exception("number of weights should be equal to number of classes")

    B, C, H, W = pred_mask.shape
    if weights is not None and num_cls > C:
        # PyTorch would raise an IndexError on pred_mask[:, i] for i >= C.
        raise IndexError("num_cls exceeds the number of channels in pred_mask")

    R, L = B * C, H * W

    # Per-class weight -> per-row weight (row r of (B*C, H*W) is class r % C).
    if weights is None:
        w_cls = jnp.ones((C,), jnp.float32)
    else:
        # Classes beyond num_cls get weight 0 (PyTorch loop only covers num_cls).
        w_cls = jnp.zeros((C,), jnp.float32).at[:num_cls].set(
            jnp.asarray(weights, jnp.float32))
    w_rows = jnp.tile(w_cls, B)                         # (R,)

    # --- Row tiling (16 preferred: bf16 native packing + bigger DMA payload). ---
    if R >= 16:
        row_tile = 16
    elif R >= 8:
        row_tile = 8
    else:
        row_tile = R                                    # full-dim block is legal
    nrb = _cdiv(R, row_tile)
    row_cover = nrb * row_tile

    # --- Lane tiling: ~MAX_BLOCK_BYTES per input block, near-even 128-aligned. ---
    max_lanes = max(128, (MAX_BLOCK_BYTES // (row_tile * 4)) // 128 * 128)
    if L <= max_lanes:
        lane_tile = L                                   # single full-dim block, no slack
        nlb_total = 1
    else:
        nlb_total = _cdiv(L, max_lanes)
        lane_tile = 128 * _cdiv(_cdiv(L, nlb_total), 128)
        nlb_total = _cdiv(L, lane_tile)
    lane_cover = nlb_total * lane_tile

    # --- v7x megacore: guarantee >=2 blocks on a parallel axis when nrb is 1/odd. ---
    n_chunks = 2 if (nrb % 2 == 1 and nlb_total >= 2) else 1
    nlb_inner = _cdiv(nlb_total, n_chunks)

    need_mask = (row_cover != R) or (lane_cover != L) or (n_chunks * nlb_inner != nlb_total)

    # Pad only the tiny per-row weight column; never the big tensors (no extra
    # HBM round trip — ragged tails are masked in-kernel instead).
    if row_cover != R:
        w_rows = jnp.concatenate([w_rows, jnp.zeros((row_cover - R,), jnp.float32)])
    w_rows = w_rows.reshape(row_cover, 1)

    # Free, contiguous NCHW reshape (no transpose, no copy).
    p2 = pred_mask.reshape(R, L)
    m2 = mask.reshape(R, L)

    def data_map(i, p, j):
        # Clamp so a chunk overshoot never issues a fully out-of-bounds DMA; the
        # duplicated block's contribution is masked to zero in-kernel.
        return (i, jnp.minimum(p * nlb_inner + j, nlb_total - 1))

    acc_w = min(lane_tile, 128)
    kernel = _make_kernel(row_tile, lane_tile, nlb_inner, nlb_total, R, L, need_mask)
    in_bytes = 2 * R * L * pred_mask.dtype.itemsize

    partials = pl.pallas_call(
        kernel,
        out_shape=jax.ShapeDtypeStruct((nrb, n_chunks, row_tile, 128), jnp.float32),
        grid_spec=pltpu.PrefetchScalarGridSpec(
            num_scalar_prefetch=0,
            grid=(nrb, n_chunks, nlb_inner),
            in_specs=[
                pl.BlockSpec((row_tile, lane_tile), data_map),
                pl.BlockSpec((row_tile, lane_tile), data_map),
                pl.BlockSpec((row_tile, 1), lambda i, p, j: (i, 0)),
            ],
            out_specs=pl.BlockSpec((1, 1, row_tile, 128),
                                   lambda i, p, j: (i, p, 0, 0)),
            scratch_shapes=[pltpu.VMEM((3, row_tile, acc_w), jnp.float32)],
        ),
        compiler_params=pltpu.CompilerParams(
            dimension_semantics=("parallel", "parallel", "arbitrary"),
            vmem_limit_bytes=VMEM_LIMIT_BYTES),
        cost_estimate=pl.CostEstimate(
            flops=4 * R * L, transcendentals=0, bytes_accessed=in_bytes),
    )(p2, m2, w_rows)

    # Tiny cross-block combine + final scalar arithmetic.
    inter = partials[:, :, 0, 0].sum()
    union = partials[:, :, 0, 1].sum()
    return 1.0 - inter * 2.0 / union   # matches PyTorch: no eps; inf/nan if union==0


def _dice_loss_ref(pred_mask, mask, weights=None, num_cls=4):
    """Pure-JAX reference mirroring the PyTorch module exactly."""
    if weights is not None:
        inter = jnp.float32(0.0)
        union = jnp.float32(0.0)
        for i in range(num_cls):
            inter = inter + (pred_mask[:, i] * mask[:, i]).sum() * weights[i]
            union = union + (pred_mask[:, i].sum() + mask[:, i].sum()) * weights[i]
    else:
        inter = (pred_mask * mask).sum()
        union = pred_mask.sum() + mask.sum()
    return 1.0 - inter * 2.0 / union


if __name__ == "__main__":
    key = jax.random.PRNGKey(0)
    k1, k2 = jax.random.split(key)

    B, C, H, W = 2, 4, 16, 16
    # pred_mask: softmax "probabilities" over classes; mask: one-hot labels.
    logits = jax.random.normal(k1, (B, C, H, W), jnp.float32)
    pred_mask = jax.nn.softmax(logits, axis=1)
    labels = jax.random.randint(k2, (B, H, W), 0, C)
    mask = jnp.transpose(jax.nn.one_hot(labels, C, dtype=jnp.float32), (0, 3, 1, 2))

    # unweighted path
    loss_u = jax.block_until_ready(dice_loss(pred_mask, mask, weights=None, num_cls=C))
    ref_u = _dice_loss_ref(pred_mask, mask, weights=None, num_cls=C)

    # weighted path (deterministic synthetic weights)
    weights = [0.1, 0.2, 0.3, 0.4]
    loss_w = jax.block_until_ready(dice_loss(pred_mask, mask, weights=weights, num_cls=C))
    ref_w = _dice_loss_ref(pred_mask, mask, weights=weights, num_cls=C)

    assert jnp.allclose(loss_u, ref_u, rtol=1e-5, atol=1e-6), (loss_u, ref_u)
    assert jnp.allclose(loss_w, ref_w, rtol=1e-5, atol=1e-6), (loss_w, ref_w)

    print("KERNEL_OK")
</pallas_src>

<mosaic_0001>
module attributes {stable_mosaic.version = 11 : i64} {
  func.func @kernel(%arg0: i32, %arg1: i32, %arg2: i32, %arg3: memref<8x256xf32, #tpu.memory_space<vmem>>, %arg4: memref<8x256xf32, #tpu.memory_space<vmem>>, %arg5: memref<8x1xf32, #tpu.memory_space<vmem>>, %arg6: memref<1x1x8x128xf32, #tpu.memory_space<vmem>>, %arg7: memref<3x8x128xf32, #tpu.memory_space<vmem>>) attributes {dimension_semantics = [#tpu.dimension_semantics<parallel>, #tpu.dimension_semantics<parallel>, #tpu.dimension_semantics<arbitrary>], iteration_bounds = array<i64: 1, 1, 1>, scalar_prefetch = 0 : i64, scratch_operands = 1 : i64, tpu.core_type = #tpu.core_type<tc>, window_params = [{transform_indices = @transform_0, window_bounds = array<i64: 8, 256>}, {transform_indices = @transform_1, window_bounds = array<i64: 8, 256>}, {transform_indices = @transform_2, window_bounds = array<i64: 8, 1>}, {transform_indices = @transform_3, window_bounds = array<i64: 1, 1, 8, 128>}]} {
    %c0_i32 = arith.constant 0 : i32
    %0 = arith.cmpi eq, %arg2, %c0_i32 : i32
    %1 = arith.extui %0 : i1 to i32
    %c0_i32_0 = arith.constant 0 : i32
    %2 = arith.cmpi ne, %1, %c0_i32_0 : i32
    scf.if %2 {
      %cst = arith.constant 0.000000e+00 : f32
      %36 = vector.broadcast %cst : f32 to vector<3x8x128xf32>
      %c0_22 = arith.constant 0 : index
      %c0_23 = arith.constant 0 : index
      %c0_24 = arith.constant 0 : index
      %37 = vector.load %arg7[%c0_22, %c0_23, %c0_24] : memref<3x8x128xf32, #tpu.memory_space<vmem>>, vector<3x8x128xf32>
      tpu.vector_store %arg7[%c0_22, %c0_23, %c0_24], %36 {strides = array<i32>} : memref<3x8x128xf32, #tpu.memory_space<vmem>>, vector<3x8x128xf32>,
    } else {
    }
    %c0 = arith.constant 0 : index
    %c0_1 = arith.constant 0 : index
    %3 = vector.load %arg3[%c0, %c0_1] : memref<8x256xf32, #tpu.memory_space<vmem>>, vector<8x256xf32>
    %c0_2 = arith.constant 0 : index
    %c0_3 = arith.constant 0 : index
    %4 = vector.load %arg4[%c0_2, %c0_3] : memref<8x256xf32, #tpu.memory_space<vmem>>, vector<8x256xf32>
    %c0_4 = arith.constant 0 : index
    %c0_5 = arith.constant 0 : index
    %c0_6 = arith.constant 0 : index
    %5 = vector.load %arg7[%c0_4, %c0_5, %c0_6] : memref<3x8x128xf32, #tpu.memory_space<vmem>>, vector<1x8x128xf32>
    %6 = vector.shape_cast %5 : vector<1x8x128xf32> to vector<8x128xf32>
    %7 = arith.mulf %3, %4 : vector<8x256xf32>
    %8 = vector.extract_strided_slice %7 {offsets = [0, 0], sizes = [8, 128], strides = [1, 1]} : vector<8x256xf32> to vector<8x128xf32>
    %9 = vector.extract_strided_slice %7 {offsets = [0, 128], sizes = [8, 128], strides = [1, 1]} : vector<8x256xf32> to vector<8x128xf32>
    %10 = arith.addf %8, %9 : vector<8x128xf32>
    %11 = arith.addf %6, %10 : vector<8x128xf32>
    %c0_7 = arith.constant 0 : index
    %c0_8 = arith.constant 0 : index
    %c0_9 = arith.constant 0 : index
    %12 = vector.load %arg7[%c0_7, %c0_8, %c0_9] : memref<3x8x128xf32, #tpu.memory_space<vmem>>, vector<1x8x128xf32>
    %13 = vector.shape_cast %12 : vector<1x8x128xf32> to vector<8x128xf32>
    %14 = vector.shape_cast %11 : vector<8x128xf32> to vector<1x8x128xf32>
    tpu.vector_store %arg7[%c0_7, %c0_8, %c0_9], %14 {strides = array<i32>} : memref<3x8x128xf32, #tpu.memory_space<vmem>>, vector<1x8x128xf32>,
    %c1 = arith.constant 1 : index
    %c0_10 = arith.constant 0 : index
    %c0_11 = arith.constant 0 : index
    %15 = vector.load %arg7[%c1, %c0_10, %c0_11] : memref<3x8x128xf32, #tpu.memory_space<vmem>>, vector<1x8x128xf32>
    %16 = vector.shape_cast %15 : vector<1x8x128xf32> to vector<8x128xf32>
    %17 = vector.extract_strided_slice %3 {offsets = [0, 0], sizes = [8, 128], strides = [1, 1]} : vector<8x256xf32> to vector<8x128xf32>
    %18 = vector.extract_strided_slice %3 {offsets = [0, 128], sizes = [8, 128], strides = [1, 1]} : vector<8x256xf32> to vector<8x128xf32>
    %19 = arith.addf %17, %18 : vector<8x128xf32>
    %20 = arith.addf %16, %19 : vector<8x128xf32>
    %c1_12 = arith.constant 1 : index
    %c0_13 = arith.constant 0 : index
    %c0_14 = arith.constant 0 : index
    %21 = vector.load %arg7[%c1_12, %c0_13, %c0_14] : memref<3x8x128xf32, #tpu.memory_space<vmem>>, vector<1x8x128xf32>
    %22 = vector.shape_cast %21 : vector<1x8x128xf32> to vector<8x128xf32>
    %23 = vector.shape_cast %20 : vector<8x128xf32> to vector<1x8x128xf32>
    tpu.vector_store %arg7[%c1_12, %c0_13, %c0_14], %23 {strides = array<i32>} : memref<3x8x128xf32, #tpu.memory_space<vmem>>, vector<1x8x128xf32>,
    %c2 = arith.constant 2 : index
    %c0_15 = arith.constant 0 : index
    %c0_16 = arith.constant 0 : index
    %24 = vector.load %arg7[%c2, %c0_15, %c0_16] : memref<3x8x128xf32, #tpu.memory_space<vmem>>, vector<1x8x128xf32>
    %25 = vector.shape_cast %24 : vector<1x8x128xf32> to vector<8x128xf32>
    %26 = vector.extract_strided_slice %4 {offsets = [0, 0], sizes = [8, 128], strides = [1, 1]} : vector<8x256xf32> to vector<8x128xf32>
    %27 = vector.extract_strided_slice %4 {offsets = [0, 128], sizes = [8, 128], strides = [1, 1]} : vector<8x256xf32> to vector<8x128xf32>
    %28 = arith.addf %26, %27 : vector<8x128xf32>
    %29 = arith.addf %25, %28 : vector<8x128xf32>
    %c2_17 = arith.constant 2 : index
    %c0_18 = arith.constant 0 : index
    %c0_19 = arith.constant 0 : index
    %30 = vector.load %arg7[%c2_17, %c0_18, %c0_19] : memref<3x8x128xf32, #tpu.memory_space<vmem>>, vector<1x8x128xf32>
    %31 = vector.shape_cast %30 : vector<1x8x128xf32> to vector<8x128xf32>
    %32 = vector.shape_cast %29 : vector<8x128xf32> to vector<1x8x128xf32>
    tpu.vector_store %arg7[%c2_17, %c0_18, %c0_19], %32 {strides = array<i32>} : memref<3x8x128xf32, #tpu.memory_space<vmem>>, vector<1x8x128xf32>,
    %c0_i32_20 = arith.constant 0 : i32
    %33 = arith.cmpi eq, %arg2, %c0_i32_20 : i32
    %34 = arith.extui %33 : i1 to i32
    %c0_i32_21 = arith.constant 0 : i32
    %35 = arith.cmpi ne, %34, %c0_i32_21 : i32
    scf.if %35 {
      %c0_22 = arith.constant 0 : index
      %c0_23 = arith.constant 0 : index
      %36 = vector.load %arg5[%c0_22, %c0_23] : memref<8x1xf32, #tpu.memory_space<vmem>>, vector<8x1xf32>
      %c0_24 = arith.constant 0 : index
      %c0_25 = arith.constant 0 : index
      %c0_26 = arith.constant 0 : index
      %37 = vector.load %arg7[%c0_24, %c0_25, %c0_26] : memref<3x8x128xf32, #tpu.memory_space<vmem>>, vector<1x8x128xf32>
      %38 = vector.shape_cast %37 : vector<1x8x128xf32> to vector<8x128xf32>
      %cst = arith.constant dense<0.000000e+00> : vector<8xf32>
      %39 = vector.multi_reduction <add>, %38, %cst [1] : vector<8x128xf32> to vector<8xf32>
      %40 = vector.shape_cast %39 : vector<8xf32> to vector<8x1xf32>
      %c1_27 = arith.constant 1 : index
      %c0_28 = arith.constant 0 : index
      %c0_29 = arith.constant 0 : index
      %41 = vector.load %arg7[%c1_27, %c0_28, %c0_29] : memref<3x8x128xf32, #tpu.memory_space<vmem>>, vector<1x8x128xf32>
      %42 = vector.shape_cast %41 : vector<1x8x128xf32> to vector<8x128xf32>
      %cst_30 = arith.constant dense<0.000000e+00> : vector<8xf32>
      %43 = vector.multi_reduction <add>, %42, %cst_30 [1] : vector<8x128xf32> to vector<8xf32>
      %44 = vector.shape_cast %43 : vector<8xf32> to vector<8x1xf32>
      %c2_31 = arith.constant 2 : index
      %c0_32 = arith.constant 0 : index
      %c0_33 = arith.constant 0 : index
      %45 = vector.load %arg7[%c2_31, %c0_32, %c0_33] : memref<3x8x128xf32, #tpu.memory_space<vmem>>, vector<1x8x128xf32>
      %46 = vector.shape_cast %45 : vector<1x8x128xf32> to vector<8x128xf32>
      %cst_34 = arith.constant dense<0.000000e+00> : vector<8xf32>
      %47 = vector.multi_reduction <add>, %46, %cst_34 [1] : vector<8x128xf32> to vector<8xf32>
      %48 = vector.shape_cast %47 : vector<8xf32> to vector<8x1xf32>
      %49 = arith.mulf %36, %40 : vector<8x1xf32>
      %50 = vector.shape_cast %49 : vector<8x1xf32> to vector<1x8x1xf32>
      %cst_35 = arith.constant dense<0.000000e+00> : vector<1xf32>
      %51 = vector.multi_reduction <add>, %50, %cst_35 [1, 2] : vector<1x8x1xf32> to vector<1xf32>
      %52 = vector.shape_cast %51 : vector<1xf32> to vector<1x1x1xf32>
      %53 = vector.extract %52[0, 0, 0] : f32 from vector<1x1x1xf32>
      %54 = arith.addf %44, %48 : vector<8x1xf32>
      %55 = arith.mulf %36, %54 : vector<8x1xf32>
      %56 = vector.shape_cast %55 : vector<8x1xf32> to vector<1x8x1xf32>
      %cst_36 = arith.constant dense<0.000000e+00> : vector<1xf32>
      %57 = vector.multi_reduction <add>, %56, %cst_36 [1, 2] : vector<1x8x1xf32> to vector<1xf32>
      %58 = vector.shape_cast %57 : vector<1xf32> to vector<1x1x1xf32>
      %59 = vector.extract %58[0, 0, 0] : f32 from vector<1x1x1xf32>
      %60 = tpu.iota {dimensions = array<i32: 1>} : vector<8x128xi32>
      %c0_i32_37 = arith.constant 0 : i32
      %61 = vector.broadcast %c0_i32_37 : i32 to vector<8x128xi32>
      %62 = arith.cmpi eq, %60, %61 : vector<8x128xi32>
      %c1_i32 = arith.constant 1 : i32
      %63 = vector.broadcast %c1_i32 : i32 to vector<8x128xi32>
      %64 = arith.cmpi eq, %60, %63 : vector<8x128xi32>
      %cst_38 = arith.constant 0.000000e+00 : f32
      %65 = vector.broadcast %59 : f32 to vector<8x128xf32>
      %66 = vector.broadcast %cst_38 : f32 to vector<8x128xf32>
      %67 = arith.select %64, %65, %66 : vector<8x128xi1>, vector<8x128xf32>
      %68 = vector.broadcast %53 : f32 to vector<8x128xf32>
      %69 = arith.select %62, %68, %67 : vector<8x128xi1>, vector<8x128xf32>
      %c0_39 = arith.constant 0 : index
      %c0_40 = arith.constant 0 : index
      %c0_41 = arith.constant 0 : index
      %c0_42 = arith.constant 0 : index
      %70 = vector.load %arg6[%c0_39, %c0_40, %c0_41, %c0_42] : memref<1x1x8x128xf32, #tpu.memory_space<vmem>>, vector<1x1x8x128xf32>
      %71 = vector.shape_cast %70 : vector<1x1x8x128xf32> to vector<8x128xf32>
      %72 = vector.shape_cast %69 : vector<8x128xf32> to vector<1x1x8x128xf32>
      tpu.vector_store %arg6[%c0_39, %c0_40, %c0_41, %c0_42], %72 {strides = array<i32>} : memref<1x1x8x128xf32, #tpu.memory_space<vmem>>, vector<1x1x8x128xf32>,
    } else {
    }
    return
  }
  func.func @transform_0(%arg0: i32, %arg1: i32, %arg2: i32) -> (i32, i32) {
    %c1_i32 = arith.constant 1 : i32
    %0 = arith.muli %arg1, %c1_i32 : i32
    %1 = arith.addi %0, %arg2 : i32
    %c0_i32 = arith.constant 0 : i32
    %2 = arith.minsi %1, %c0_i32 : i32
    %c0_i32_0 = arith.constant 0 : i32
    return %arg0, %2 : i32, i32
  }
  func.func @transform_1(%arg0: i32, %arg1: i32, %arg2: i32) -> (i32, i32) {
    %c1_i32 = arith.constant 1 : i32
    %0 = arith.muli %arg1, %c1_i32 : i32
    %1 = arith.addi %0, %arg2 : i32
    %c0_i32 = arith.constant 0 : i32
    %2 = arith.minsi %1, %c0_i32 : i32
    %c0_i32_0 = arith.constant 0 : i32
    return %arg0, %2 : i32, i32
  }
  func.func @transform_2(%arg0: i32, %arg1: i32, %arg2: i32) -> (i32, i32) {
    %c0_i32 = arith.constant 0 : i32
    %c0_i32_0 = arith.constant 0 : i32
    return %arg0, %c0_i32 : i32, i32
  }
  func.func @transform_3(%arg0: i32, %arg1: i32, %arg2: i32) -> (i32, i32, i32, i32) {
    %c0_i32 = arith.constant 0 : i32
    %c0_i32_0 = arith.constant 0 : i32
    %c0_i32_1 = arith.constant 0 : i32
    return %arg0, %arg1, %c0_i32, %c0_i32_0 : i32, i32, i32, i32
  }
}

</mosaic_0001>

<llo_original>
// kernel: tpu_custom_call.1
$region0: #{tpu_custom_call.1}
  #allocation0 [shape = 'u32[]', space=smem, size = 0x4, offset = 0x4, fixed_abs, tag = 'smem constant byte address 0x4 - core index']
  #allocation1 [shape = 'u32[72,128]{1,0:T(1,128)}', space=vmem, size = 0x9000, scoped, tag = 'internal scratch']
  #allocation2 [shape = 'f32[3,8,128]{2,1,0:T(8,128)}', space=vmem, size = 0x3000, scoped, tag = 'scratch operand']
  %s0 = inlined_call_operand.hbm [shape: f32[8,256], index: 0, kind: input, shape index: {}]
  %s1 = inlined_call_operand.hbm [shape: f32[8,256], index: 1, kind: input, shape index: {}]
  %s2 = inlined_call_operand.vmem [shape: f32[8,1], index: 2, kind: input, shape index: {}]
  %s3 = inlined_call_operand.hbm [shape: f32[1,1,8,128], index: 3, kind: output, shape index: {}]
  %s4 = sld [smem:[#allocation0]]
  $region38: #{tpu_custom_call.1} parent=0
    _
  %s6 = ssub.s32 1, %s4
  %s7 = scalar_select 0, %s6, %s4
  $region1: #{tpu_custom_call.1} parent=0
    #allocation3 [shape = 'u8[8192]{0}', space=vmem, size = 0x2000, scoped, tag = 'input window, operand 0, single buffered']
    #allocation4 [shape = 's32[1]{0}', space=sflag, size = 0x4, scoped, tag = 'scoped memory for tpu_custom_call.1']
    #allocation5 [shape = 's32[1]{0}', space=sflag, size = 0x4, scoped, tag = 'scoped memory for tpu_custom_call.1']
    #allocation6 [shape = 'u8[8192]{0}', space=vmem, size = 0x2000, scoped, tag = 'input window, operand 1, single buffered']
    #allocation7 [shape = 's32[1]{0}', space=sflag, size = 0x4, scoped, tag = 'scoped memory for tpu_custom_call.1']
    #allocation8 [shape = 'u8[4096]{0}', space=vmem, size = 0x1000, scoped, tag = 'output window, operand 0, single buffered']
    %8 = vsyncpa [#allocation4], 0
    %9 = vsyncpa [#allocation7], 0
    %10 = vsyncpa [#allocation5], 0
    // Predicated region
    $region2: #{tpu_custom_call.1} parent=1 // pred_check
      _
    $region3: #{tpu_custom_call.1} parent=1 // pred_check_branch
      %12 = sbr.rel (0) target = $region5
    $region4: #{tpu_custom_call.1} parent=1 // pred_region
      %s13 = sadd.s32 0, 0
      %p14 = scmp.lt.s32.totalorder %s13, 0
      %s15 = scalar_select %p14, %s13, 0
      %s16 = smul.u32 2, %s15
      %18 = vsyncadd [#allocation4], 0
      %s19 = smul.addr %s16, 8
      %s20 = scalar_lea.hbm %s0, %s19
      %s22 = sshll.u32 %s20, 4
      %s23 = int_to_ptr.hbm [resolvable:$true] %s22
      %s24 = sshll.u32 [#allocation3], 4
      %s25 = int_to_ptr.vmem [resolvable:$true] %s24
      %27 = dma.hbm_to_vmem [thread:$0]  %s23, 256, %s25, [#allocation4]
    $region5: #{tpu_custom_call.1} parent=1 // pred_fallthru
      _
    // Predicated region
    $region6: #{tpu_custom_call.1} parent=1 // pred_check
      _
    $region7: #{tpu_custom_call.1} parent=1 // pred_check_branch
      %29 = sbr.rel (0) target = $region9
    $region8: #{tpu_custom_call.1} parent=1 // pred_region
      %s30 = sadd.s32 0, 0
      %p31 = scmp.lt.s32.totalorder %s30, 0
      %s32 = scalar_select %p31, %s30, 0
      %s33 = smul.u32 2, %s32
      %35 = vsyncadd [#allocation7], 0
      %s36 = smul.addr %s33, 8
      %s37 = scalar_lea.hbm %s1, %s36
      %s39 = sshll.u32 %s37, 4
      %s40 = int_to_ptr.hbm [resolvable:$true] %s39
      %s41 = sshll.u32 [#allocation6], 4
      %s42 = int_to_ptr.vmem [resolvable:$true] %s41
      %44 = dma.hbm_to_vmem [thread:$0]  %s40, 256, %s42, [#allocation7]
    $region9: #{tpu_custom_call.1} parent=1 // pred_fallthru
      _
    // Predicated region
    $region10: #{tpu_custom_call.1} parent=1 // pred_check
      _
    $region11: #{tpu_custom_call.1} parent=1 // pred_check_branch
      %46 = sbr.rel (0) target = $region13
    $region12: #{tpu_custom_call.1} parent=1 // pred_region
      _
    $region13: #{tpu_custom_call.1} parent=1 // pred_fallthru
      _
    // Predicated region
    $region14: #{tpu_custom_call.1} parent=1 // pred_check
      _
    $region15: #{tpu_custom_call.1} parent=1 // pred_check_branch
      %48 = sbr.rel (0) target = $region17
    $region16: #{tpu_custom_call.1} parent=1 // pred_region
      %50 = dma.done [#allocation4], 256
    $region17: #{tpu_custom_call.1} parent=1 // pred_fallthru
      _
    // Predicated region
    $region18: #{tpu_custom_call.1} parent=1 // pred_check
      _
    $region19: #{tpu_custom_call.1} parent=1 // pred_check_branch
      %52 = sbr.rel (0) target = $region21
    $region20: #{tpu_custom_call.1} parent=1 // pred_region
      %54 = dma.done [#allocation7], 256
    $region21: #{tpu_custom_call.1} parent=1 // pred_fallthru
      _
    %s55 = sadd.s32 0, 0
    %p56 = scmp.lt.s32.totalorder %s55, 0
    %s57 = scalar_select %p56, %s55, 0
    %s58 = smul.u32 2, %s57
    %s59 = sadd.s32 0, 0
    %p60 = scmp.lt.s32.totalorder %s59, 0
    %s61 = scalar_select %p60, %s59, 0
    %s62 = smul.u32 2, %s61
    %p63 = scmp.eq.s32.totalorder 0, 0
    // Predicated region
    $region22: #{tpu_custom_call.1} parent=1 // pred_check
      %p64 = pneg %p63
    $region23: #{tpu_custom_call.1} parent=1 // pred_check_branch
      %66 = sbr.rel (%p64) target = $region25
    $region24: #{tpu_custom_call.1} parent=1 // pred_region
      %67 = vst [vmem:[#allocation2] sm:$0xff] 0.0
      %68 = vst [vmem:[#allocation2 + $0x8] sm:$0xff] 0.0
      %69 = vst [vmem:[#allocation2 + $0x10] sm:$0xff] 0.0
    $region25: #{tpu_custom_call.1} parent=1 // pred_fallthru
      _
    %v70 = vld [vmem:[#allocation3] sm:$0xff]
    %v71 = vld [vmem:[#allocation3 + $0x8] sm:$0xff]
    %v72 = vld [vmem:[#allocation6] sm:$0xff]
    %v73 = vld [vmem:[#allocation6 + $0x8] sm:$0xff]
    %v74 = vld [vmem:[#allocation2] sm:$0xff]
    %v75 = vmul.f32 %v70, %v72
    %v76 = vmul.f32 %v71, %v73
    %v77 = vadd.f32 %v75, %v76
    %v78 = vadd.f32 %v74, %v77
    %79 = vst [vmem:[#allocation2] sm:$0xff] %v78
    %s80 = scalar_lea.vmem [#allocation2], 8
    %v81 = vld [vmem:[%s80] sm:$0xff]
    %v82 = vadd.f32 %v70, %v71
    %v83 = vadd.f32 %v81, %v82
    %84 = vst [vmem:[%s80] sm:$0xff] %v83
    %s85 = scalar_lea.vmem [#allocation2], 16
    %v86 = vld [vmem:[%s85] sm:$0xff]
    %v87 = vadd.f32 %v72, %v73
    %v88 = vadd.f32 %v86, %v87
    %89 = vst [vmem:[%s85] sm:$0xff] %v88
    // Predicated region
    $region26: #{tpu_custom_call.1} parent=1 // pred_check
      %p90 = pneg %p63
    $region27: #{tpu_custom_call.1} parent=1 // pred_check_branch
      %92 = sbr.rel (%p90) target = $region29
    $region28: #{tpu_custom_call.1} parent=1 // pred_region
      %v93 = vld [vmem:[%s2] sm:$0xff]
      %v94 = vld [vmem:[#allocation2] sm:$0xff]
      %95 = vadd.xlane.f32.xlu0 %v94
      %v96 = vpop.xlane.xlu0 %95
      %v97 = vld [vmem:[%s80] sm:$0xff]
      %98 = vadd.xlane.f32.xlu0 %v97
      %v99 = vpop.xlane.xlu0 %98
      %v100 = vld [vmem:[%s85] sm:$0xff]
      %101 = vadd.xlane.f32.xlu0 %v100
      %v102 = vpop.xlane.xlu0 %101
      %v103 = vmul.f32 %v93, %v96
      %vm104 = vcmask 7168
      %v105 = vsel %vm104, %v103, 0.0
      %106 = vadd.xlane.f32.xlu0 %v105
      %v107 = vpop.xlane.xlu0 %106
      %v108 = vrot.slane %v107, 4
      %v109 = vadd.f32 %v107, %v108
      %v110 = vrot.slane %v109, 2
      %v111 = vadd.f32 %v109, %v110
      %v112 = vrot.slane %v111, 1
      %v113 = vadd.f32 %v111, %v112
      %s114 = vtos %v113
      %v115 = vadd.f32 %v99, %v102
      %v116 = vmul.f32 %v93, %v115
      %v117 = vsel %vm104, %v116, 0.0
      %118 = vadd.xlane.f32.xlu0 %v117
      %v119 = vpop.xlane.xlu0 %118
      %v120 = vrot.slane %v119, 4
      %v121 = vadd.f32 %v119, %v120
      %v122 = vrot.slane %v121, 2
      %v123 = vadd.f32 %v121, %v122
      %v124 = vrot.slane %v123, 1
      %v125 = vadd.f32 %v123, %v124
      %s126 = vtos %v125
      %v127 = vlaneseq
      %v128 = vand.u32 %v127, 127
      %vm129 = vcmp.eq.s32.totalorder %v128, 0
      %vm130 = vcmp.eq.s32.totalorder %v128, 1
      %v131 = vstv %s126
      %v132 = vsel %vm130, %v131, 0.0
      %v133 = vstv %s114
      %v134 = vsel %vm129, %v133, %v132
      %135 = vst [vmem:[#allocation8] sm:$0xff] %v134
    $region29: #{tpu_custom_call.1} parent=1 // pred_fallthru
      _
    // Predicated region
    $region30: #{tpu_custom_call.1} parent=1 // pred_check
      _
    $region31: #{tpu_custom_call.1} parent=1 // pred_check_branch
      %137 = sbr.rel (0) target = $region33
    $region32: #{tpu_custom_call.1} parent=1 // pred_region
      %139 = vsyncadd [#allocation5], 0
      %s141 = sshll.u32 [#allocation8], 4
      %s142 = int_to_ptr.vmem [resolvable:$true] %s141
      %s143 = sshll.u32 %s3, 4
      %s144 = int_to_ptr.hbm [resolvable:$true] %s143
      %146 = dma.vmem_to_hbm [thread:$0]  %s142, 128, %s144, [#allocation5]
    $region33: #{tpu_custom_call.1} parent=1 // pred_fallthru
      _
    // Predicated region
    $region34: #{tpu_custom_call.1} parent=1 // pred_check
      _
    $region35: #{tpu_custom_call.1} parent=1 // pred_check_branch
      %148 = sbr.rel (0) target = $region37
    $region36: #{tpu_custom_call.1} parent=1 // pred_region
      %150 = dma.done [#allocation5], 128
    $region37: #{tpu_custom_call.1} parent=1 // pred_fallthru
      _
    %151 = vsyncpa [#allocation4], 1
    %152 = vsyncpa [#allocation7], 1
    %153 = vsyncpa [#allocation5], 1

</llo_original>
